<compile_context>
chip_gen: v7x
topology: tpu7x:2x2x1
jax: 0.10.0
libtpu: 0.0.40
codegen_flags: <defaults>
</compile_context>

<pallas_src>
import functools

import jax
import jax.numpy as jnp
from jax import lax
from jax.experimental import pallas as pl
from jax.experimental.pallas import tpu as pltpu

GAMMA = 2.0  # module default (alpha=None, gamma=2); kernel exploits gamma == 2 exactly


def _focal_loss_kernel(logits_ref, targets_ref, out_ref, *, n_total, tile_n):
    # logits_ref: (TILE_N, C) input dtype, targets_ref: (TILE_N, 1) i32,
    # out_ref:    (1, 128) f32 -> per-tile partial sum in lane 0.
    pid = pl.program_id(0)

    x = logits_ref[...].astype(jnp.float32)            # f32 math (v5e has no bf16 VPU/EUP)
    tgt = targets_ref[...]                              # (TILE_N, 1) int32
    tn, c = x.shape

    # Numerically stable softmax pieces (exp count = TILE_N * C, the unavoidable EUP load).
    m = jnp.max(x, axis=-1, keepdims=True)              # (TILE_N, 1)
    ex = jnp.exp(x - m)                                  # (TILE_N, C)
    sum_ex = jnp.sum(ex, axis=-1, keepdims=True)         # (TILE_N, 1)

    # Gather target logit / target softmax numerator via one-hot mask (VPU-friendly).
    class_ids = lax.broadcasted_iota(jnp.int32, (tn, c), 1)
    onehot = class_ids == tgt                             # (TILE_N, C) bool
    tgt_logit = jnp.sum(jnp.where(onehot, x, 0.0), axis=-1, keepdims=True)
    tgt_ex = jnp.sum(jnp.where(onehot, ex, 0.0), axis=-1, keepdims=True)

    # ce = logsumexp - target_logit  (clamped >= 0 against rounding)
    ce = jnp.maximum(m + jnp.log(sum_ex) - tgt_logit, 0.0)     # (TILE_N, 1)
    # pt = softmax prob of the true class, without a second exp.
    pt = tgt_ex * pl.reciprocal(sum_ex, approx=True)            # (TILE_N, 1)
    d = jnp.maximum(1.0 - pt, 0.0)
    focal = d * d * ce                                          # gamma == 2 -> explicit square

    # Mask rows past the true batch size (padding in the last tile).
    row = lax.broadcasted_iota(jnp.int32, (tn, 1), 0) + pid * tile_n
    focal = jnp.where(row < n_total, focal, 0.0)

    partial = jnp.sum(focal)                                    # scalar partial sum

    # Lane-dense per-tile output: partial sum in lane 0, zeros elsewhere.
    lane = lax.broadcasted_iota(jnp.int32, (1, 128), 1)
    out_ref[...] = jnp.where(lane == 0, partial, 0.0)


def weighted_focal_loss(logits, targets):
    """logits: (N, C) float (f32/bf16), targets: (N,) int class indices -> scalar f32."""
    n, c = logits.shape
    targets2d = targets.astype(jnp.int32).reshape(n, 1)

    # Pick a large batch tile but keep the double-buffered (TILE_N, C) logits tile
    # well under the scoped-VMEM budget of every generation (incl. v7x's 64 MiB):
    # budget ~4 MiB per buffer -> 8 MiB double-buffered for the streaming input.
    bytes_per_row = c * jnp.dtype(logits.dtype).itemsize
    tile_n = max(8, min(1024, (4 * 1024 * 1024) // max(bytes_per_row, 1)))
    tile_n = (tile_n // 8) * 8
    # Never make the tile bigger than the (8-rounded) batch itself.
    tile_n = min(tile_n, max(8, ((n + 7) // 8) * 8))

    num_tiles = pl.cdiv(n, tile_n)
    n_pad = num_tiles * tile_n
    if n_pad != n:
        logits = jnp.pad(logits, ((0, n_pad - n), (0, 0)))
        targets2d = jnp.pad(targets2d, ((0, n_pad - n), (0, 0)))

    kernel = functools.partial(_focal_loss_kernel, n_total=n, tile_n=tile_n)

    partial_sums = pl.pallas_call(
        kernel,
        out_shape=jax.ShapeDtypeStruct((num_tiles, 128), jnp.float32),
        grid_spec=pltpu.PrefetchScalarGridSpec(
            num_scalar_prefetch=0,
            grid=(num_tiles,),
            in_specs=[
                pl.BlockSpec((tile_n, c), lambda i: (i, 0)),   # streamed logits tile
                pl.BlockSpec((tile_n, 1), lambda i: (i, 0)),   # streamed targets tile
            ],
            out_specs=pl.BlockSpec((1, 128), lambda i: (i, 0)),
        ),
        compiler_params=pltpu.CompilerParams(
            # Independent per-tile partial sums -> parallel grid (megacore on v7x).
            dimension_semantics=("parallel",),
            vmem_limit_bytes=32 * 1024 * 1024,
        ),
    )(logits, targets2d)   # no wrapper-side f32 cast: stream the native dtype

    # Final mean over the true batch size (padded rows contributed zero).
    return jnp.sum(partial_sums) / jnp.float32(n)
    # TODO(synk): class-dim tiling with online logsumexp for very large C (thousands of classes).


if __name__ == "__main__":
    key = jax.random.PRNGKey(0)
    k1, k2 = jax.random.split(key)

    N, C = 8, 32  # small batch of logits over 32 classes
    logits = jax.random.normal(k1, (N, C), dtype=jnp.float32)
    targets = jax.random.randint(k2, (N,), 0, C, dtype=jnp.int32)

    loss = weighted_focal_loss(logits, targets)
    jax.block_until_ready(loss)

    # reference check in plain JAX (same math as the torch focal loss)
    logp = jax.nn.log_softmax(logits, axis=-1)
    ce_ref = -jnp.take_along_axis(logp, targets[:, None], axis=-1)[:, 0]
    pt_ref = jnp.exp(-ce_ref)
    ref = jnp.mean(((1.0 - pt_ref) ** GAMMA) * ce_ref)
    assert jnp.allclose(loss, ref, rtol=2e-3, atol=1e-5), (loss, ref)

    print("KERNEL_OK")
</pallas_src>

<mosaic_0001>
module attributes {stable_mosaic.version = 11 : i64} {
  func.func @_focal_loss_kernel(%arg0: i32, %arg1: memref<8x32xf32, #tpu.memory_space<vmem>>, %arg2: memref<8x1xi32, #tpu.memory_space<vmem>>, %arg3: memref<1x128xf32, #tpu.memory_space<vmem>>) attributes {dimension_semantics = [#tpu.dimension_semantics<parallel>], iteration_bounds = array<i64: 1>, scalar_prefetch = 0 : i64, scratch_operands = 0 : i64, tpu.core_type = #tpu.core_type<tc>, window_params = [{transform_indices = @transform_0, window_bounds = array<i64: 8, 32>}, {transform_indices = @transform_1, window_bounds = array<i64: 8, 1>}, {transform_indices = @transform_2, window_bounds = array<i64: 1, 128>}]} {
    %c0 = arith.constant 0 : index
    %c0_0 = arith.constant 0 : index
    %0 = vector.load %arg1[%c0, %c0_0] : memref<8x32xf32, #tpu.memory_space<vmem>>, vector<8x32xf32>
    %c0_1 = arith.constant 0 : index
    %c0_2 = arith.constant 0 : index
    %1 = vector.load %arg2[%c0_1, %c0_2] : memref<8x1xi32, #tpu.memory_space<vmem>>, vector<8x1xi32>
    %cst = arith.constant dense<0xFF800000> : vector<8xf32>
    %2 = vector.multi_reduction <maximumf>, %0, %cst [1] : vector<8x32xf32> to vector<8xf32>
    %3 = vector.shape_cast %2 : vector<8xf32> to vector<8x1xf32>
    %4 = vector.broadcast %3 : vector<8x1xf32> to vector<8x32xf32>
    %5 = arith.subf %0, %4 : vector<8x32xf32>
    %6 = math.exp %5 : vector<8x32xf32>
    %cst_3 = arith.constant dense<0.000000e+00> : vector<8xf32>
    %7 = vector.multi_reduction <add>, %6, %cst_3 [1] : vector<8x32xf32> to vector<8xf32>
    %8 = vector.shape_cast %7 : vector<8xf32> to vector<8x1xf32>
    %9 = tpu.iota {dimensions = array<i32: 1>} : vector<8x32xi32>
    %10 = vector.broadcast %1 : vector<8x1xi32> to vector<8x32xi32>
    %11 = arith.cmpi eq, %9, %10 : vector<8x32xi32>
    %cst_4 = arith.constant 0.000000e+00 : f32
    %12 = vector.broadcast %cst_4 : f32 to vector<8x32xf32>
    %13 = arith.select %11, %0, %12 : vector<8x32xi1>, vector<8x32xf32>
    %cst_5 = arith.constant dense<0.000000e+00> : vector<8xf32>
    %14 = vector.multi_reduction <add>, %13, %cst_5 [1] : vector<8x32xf32> to vector<8xf32>
    %15 = vector.shape_cast %14 : vector<8xf32> to vector<8x1xf32>
    %cst_6 = arith.constant 0.000000e+00 : f32
    %16 = vector.broadcast %cst_6 : f32 to vector<8x32xf32>
    %17 = arith.select %11, %6, %16 : vector<8x32xi1>, vector<8x32xf32>
    %cst_7 = arith.constant dense<0.000000e+00> : vector<8xf32>
    %18 = vector.multi_reduction <add>, %17, %cst_7 [1] : vector<8x32xf32> to vector<8xf32>
    %19 = vector.shape_cast %18 : vector<8xf32> to vector<8x1xf32>
    %20 = math.log %8 : vector<8x1xf32>
    %21 = arith.addf %3, %20 : vector<8x1xf32>
    %22 = arith.subf %21, %15 : vector<8x1xf32>
    %cst_8 = arith.constant 0.000000e+00 : f32
    %23 = vector.broadcast %cst_8 : f32 to vector<8x1xf32>
    %24 = arith.maximumf %22, %23 : vector<8x1xf32>
    %25 = tpu.reciprocal %8 {approx = true} : vector<8x1xf32> -> vector<8x1xf32>
    %26 = arith.mulf %19, %25 : vector<8x1xf32>
    %cst_9 = arith.constant 1.000000e+00 : f32
    %27 = vector.broadcast %cst_9 : f32 to vector<8x1xf32>
    %28 = arith.subf %27, %26 : vector<8x1xf32>
    %cst_10 = arith.constant 0.000000e+00 : f32
    %29 = vector.broadcast %cst_10 : f32 to vector<8x1xf32>
    %30 = arith.maximumf %28, %29 : vector<8x1xf32>
    %31 = arith.mulf %30, %30 : vector<8x1xf32>
    %32 = arith.mulf %31, %24 : vector<8x1xf32>
    %33 = tpu.iota {dimensions = array<i32: 0>} : vector<8x1xi32>
    %c8_i32 = arith.constant 8 : i32
    %34 = arith.muli %arg0, %c8_i32 : i32
    %35 = vector.broadcast %34 : i32 to vector<8x1xi32>
    %36 = arith.addi %33, %35 : vector<8x1xi32>
    %c8_i32_11 = arith.constant 8 : i32
    %37 = vector.broadcast %c8_i32_11 : i32 to vector<8x1xi32>
    %38 = arith.cmpi slt, %36, %37 : vector<8x1xi32>
    %cst_12 = arith.constant 0.000000e+00 : f32
    %39 = vector.broadcast %cst_12 : f32 to vector<8x1xf32>
    %40 = arith.select %38, %32, %39 : vector<8x1xi1>, vector<8x1xf32>
    %41 = vector.shape_cast %40 : vector<8x1xf32> to vector<1x8x1xf32>
    %cst_13 = arith.constant dense<0.000000e+00> : vector<1xf32>
    %42 = vector.multi_reduction <add>, %41, %cst_13 [1, 2] : vector<1x8x1xf32> to vector<1xf32>
    %43 = vector.shape_cast %42 : vector<1xf32> to vector<1x1x1xf32>
    %44 = vector.extract %43[0, 0, 0] : f32 from vector<1x1x1xf32>
    %45 = tpu.iota {dimensions = array<i32: 1>} : vector<1x128xi32>
    %c0_i32 = arith.constant 0 : i32
    %46 = vector.broadcast %c0_i32 : i32 to vector<1x128xi32>
    %47 = arith.cmpi eq, %45, %46 : vector<1x128xi32>
    %cst_14 = arith.constant 0.000000e+00 : f32
    %48 = vector.broadcast %44 : f32 to vector<1x128xf32>
    %49 = vector.broadcast %cst_14 : f32 to vector<1x128xf32>
    %50 = arith.select %47, %48, %49 : vector<1x128xi1>, vector<1x128xf32>
    %c0_15 = arith.constant 0 : index
    %c0_16 = arith.constant 0 : index
    %51 = vector.load %arg3[%c0_15, %c0_16] : memref<1x128xf32, #tpu.memory_space<vmem>>, vector<1x128xf32>
    tpu.vector_store %arg3[%c0_15, %c0_16], %50 {strides = array<i32>} : memref<1x128xf32, #tpu.memory_space<vmem>>, vector<1x128xf32>,
    return
  }
  func.func @transform_0(%arg0: i32) -> (i32, i32) {
    %c0_i32 = arith.constant 0 : i32
    %c0_i32_0 = arith.constant 0 : i32
    return %arg0, %c0_i32 : i32, i32
  }
  func.func @transform_1(%arg0: i32) -> (i32, i32) {
    %c0_i32 = arith.constant 0 : i32
    %c0_i32_0 = arith.constant 0 : i32
    return %arg0, %c0_i32 : i32, i32
  }
  func.func @transform_2(%arg0: i32) -> (i32, i32) {
    %c0_i32 = arith.constant 0 : i32
    %c0_i32_0 = arith.constant 0 : i32
    return %arg0, %c0_i32 : i32, i32
  }
}

</mosaic_0001>

<llo_original>
// kernel: tpu_custom_call.1
$region0: #{tpu_custom_call.1}
  #allocation0 [shape = 'u32[]', space=smem, size = 0x4, offset = 0x4, fixed_abs, tag = 'smem constant byte address 0x4 - core index']
  #allocation1 [shape = 'u32[144,128]{1,0:T(1,128)}', space=vmem, size = 0x12000, scoped, tag = 'internal scratch']
  %s0 = inlined_call_operand.vmem [shape: f32[8,32], index: 0, kind: input, shape index: {}]
  %s1 = inlined_call_operand.vmem [shape: s32[8,1], index: 1, kind: input, shape index: {}]
  %s2 = inlined_call_operand.hbm [shape: f32[1,128], index: 2, kind: output, shape index: {}]
  %s3 = sld [smem:[#allocation0]]
  $region18: #{tpu_custom_call.1} parent=0
    _
  %s5 = ssub.s32 1, %s3
  %s6 = scalar_select 0, %s5, %s3
  $region1: #{tpu_custom_call.1} parent=0
    #allocation2 [shape = 'u8[512]{0}', space=vmem, size = 0x400, scoped, tag = 'output window, operand 0, single buffered']
    #allocation3 [shape = 's32[1]{0}', space=sflag, size = 0x4, scoped, tag = 'scoped memory for tpu_custom_call.1']
    %7 = vsyncpa [#allocation3], 0
    // Predicated region
    $region2: #{tpu_custom_call.1} parent=1 // pred_check
      _
    $region3: #{tpu_custom_call.1} parent=1 // pred_check_branch
      %9 = sbr.rel (0) target = $region5
    $region4: #{tpu_custom_call.1} parent=1 // pred_region
      _
    $region5: #{tpu_custom_call.1} parent=1 // pred_fallthru
      _
    // Predicated region
    $region6: #{tpu_custom_call.1} parent=1 // pred_check
      _
    $region7: #{tpu_custom_call.1} parent=1 // pred_check_branch
      %11 = sbr.rel (0) target = $region9
    $region8: #{tpu_custom_call.1} parent=1 // pred_region
      _
    $region9: #{tpu_custom_call.1} parent=1 // pred_fallthru
      _
    %v12 = vld [vmem:[%s0] sm:$0xff]
    %v13 = vld [vmem:[%s1] sm:$0xff]
    %vm14 = vcmask 261120
    %v15 = vsel %vm14, %v12, -inf
    %16 = vmax.xlane.f32.xlu0 %v15
    %v17 = vpop.xlane.xlu0 %16
    %v18 = vsub.f32 %v12, %v17
    %v19 = vmul.f32 %v18, 1.442695
    %v20 = vpow.pop %v19
    %v21 = vsel %vm14, %v20, 0.0
    %22 = vadd.xlane.f32.xlu0 %v21
    %v23 = vpop.xlane.xlu0 %22
    %v24 = vlaneseq
    %v25 = vand.u32 %v24, 127
    %26 = vset.pattern.permute.xlu0 0
    %27 = vperm.xlu0 %26, %v13
    %v28 = vpop.permute.xlu0 %27
    %vm29 = vcmp.eq.s32.totalorder %v25, %v28
    %v30 = vsel %vm29, %v12, 0.0
    %v31 = vsel %vm14, %v30, 0.0
    %32 = vadd.xlane.f32.xlu0 %v31
    %v33 = vpop.xlane.xlu0 %32
    %v34 = vsel %vm29, %v20, 0.0
    %v35 = vsel %vm14, %v34, 0.0
    %36 = vadd.xlane.f32.xlu0 %v35
    %v37 = vpop.xlane.xlu0 %36
    %v38 = vlog2.pop %v23
    %v39 = vmul.f32 %v38, 0.6931472
    %v40 = vadd.f32 %v17, %v39
    %v41 = vsub.f32 %v40, %v33
    %v42 = vmax.f32 %v41, 0.0
    %v43 = vrcp.pop %v23
    %v44 = vmul.f32 %v37, %v43
    %v45 = vsub.f32 1.0, %v44
    %v46 = vmax.f32 %v45, 0.0
    %v47 = vmul.f32 %v46, %v46
    %v48 = vmul.f32 %v47, %v42
    %v49 = vlaneseq
    %v50 = vshrl.u32 %v49, 7
    %s51 = smul.u32 0, 8
    %v52 = vstv %s51
    %v53 = vadd.s32 %v50, %v52
    %vm54 = vcmp.lt.s32.totalorder %v53, 8
    %v55 = vsel %vm54, %v48, 0.0
    %vm56 = vcmask 7168
    %v57 = vsel %vm56, %v55, 0.0
    %58 = vadd.xlane.f32.xlu0 %v57
    %v59 = vpop.xlane.xlu0 %58
    %v60 = vrot.slane %v59, 4
    %v61 = vadd.f32 %v59, %v60
    %v62 = vrot.slane %v61, 2
    %v63 = vadd.f32 %v61, %v62
    %v64 = vrot.slane %v63, 1
    %v65 = vadd.f32 %v63, %v64
    %s66 = vtos %v65
    %vm67 = vcmp.eq.s32.totalorder %v25, 0
    %v68 = vstv %s66
    %v69 = vsel %vm67, %v68, 0.0
    %70 = vst [vmem:[#allocation2] sm:$0x1] %v69
    // Predicated region
    $region10: #{tpu_custom_call.1} parent=1 // pred_check
      _
    $region11: #{tpu_custom_call.1} parent=1 // pred_check_branch
      %72 = sbr.rel (0) target = $region13
    $region12: #{tpu_custom_call.1} parent=1 // pred_region
      %s74 = ssub.s32 16, 16
      %75 = vsyncadd [#allocation3], %s74
      %s77 = sshll.u32 [#allocation2], 4
      %s78 = int_to_ptr.vmem [resolvable:$true] %s77
      %80 = dma.vmem_to_hbm [thread:$0]  %s78, 16, %s2, [#allocation3]
    $region13: #{tpu_custom_call.1} parent=1 // pred_fallthru
      _
    // Predicated region
    $region14: #{tpu_custom_call.1} parent=1 // pred_check
      _
    $region15: #{tpu_custom_call.1} parent=1 // pred_check_branch
      %82 = sbr.rel (0) target = $region17
    $region16: #{tpu_custom_call.1} parent=1 // pred_region
      %83 = dma.done [#allocation3], 16
    $region17: #{tpu_custom_call.1} parent=1 // pred_fallthru
      _
    %84 = vsyncpa [#allocation3], 1

</llo_original>
